<compile_context>
chip_gen: v6e
topology: v6e:2x2x1
jax: 0.10.0
libtpu: 0.0.40
codegen_flags: <defaults>
</compile_context>

<pallas_src>
import jax
import jax.numpy as jnp
import numpy as np
from jax.experimental import pallas as pl
from jax.experimental.pallas import tpu as pltpu


def _round_up(x, m):
    return ((x + m - 1) // m) * m


def discriminator_kernel(s_ref, a_ref,
                         w1s_ref, w1a_ref, b1_ref,
                         w2_ref, b2_ref,
                         w3_ref, b3_ref,
                         o_ref):
    # fc1 (split-weight form of cat([s, a], dim=1) @ W1) + ReLU.  Both dots accumulate
    # in f32 on the MXU; bias broadcast over sublanes is a cheap VPU add.
    h1 = (jnp.dot(s_ref[...], w1s_ref[...], preferred_element_type=jnp.float32)
          + jnp.dot(a_ref[...], w1a_ref[...], preferred_element_type=jnp.float32)
          + b1_ref[...])
    h1 = jnp.maximum(h1, 0.0)

    # fc2 + ReLU
    h2 = jnp.dot(h1, w2_ref[...], preferred_element_type=jnp.float32) + b2_ref[...]
    h2 = jnp.maximum(h2, 0.0)

    # fc3 (lane-padded to 128 so the store is unmasked) + Sigmoid (exp on the EUP).
    z = jnp.dot(h2, w3_ref[...], preferred_element_type=jnp.float32) + b3_ref[...]
    o_ref[...] = jax.nn.sigmoid(z)


def discriminator_forward(state, action, params, *, tb=1024):
    """state: (B, state_dim) f32, action: (B, action_dim) f32 -> (B, action_dim) f32."""
    w1, b1, w2, b2, w3, b3 = params
    B, state_dim = state.shape
    action_dim = action.shape[1]
    h2_dim = w2.shape[1]

    # --- split W1 so the kernel never concatenates along lanes --------------------
    w1_s = w1[:state_dim]          # (state_dim, 64)
    w1_a = w1[state_dim:]          # (action_dim, 64)

    # --- pad fc3 output dim to a lane-dense width (multiple of 128) ---------------
    out_pad = _round_up(max(action_dim, 128), 128)
    w3p = jnp.zeros((h2_dim, out_pad), w3.dtype).at[:, :action_dim].set(w3)
    b3p = jnp.zeros((1, out_pad), b3.dtype).at[:, :action_dim].set(b3)

    # --- batch tiling: one grid axis over batch tiles ------------------------------
    # Tile rows are a multiple of 8 (sublane quantum); small batches collapse to one
    # tile so the grid overhead (~0.35 us/step) only appears when it pays for itself.
    tb = max(8, min(tb, _round_up(B, 8)))
    B_pad = _round_up(B, tb)
    if B_pad != B:
        pad = B_pad - B
        state = jnp.pad(state, ((0, pad), (0, 0)))
        action = jnp.pad(action, ((0, pad), (0, 0)))
    grid = (B_pad // tb,)

    # Batch-tiled activations; weights/biases are whole VMEM-resident blocks
    # (index_map -> (0, 0) every step, so they are fetched once and reused).
    tiled = lambda cols: pl.BlockSpec((tb, cols), lambda i: (i, 0))
    whole = lambda shape: pl.BlockSpec(shape, lambda i: (0, 0))

    flops_per_row = 2 * (state_dim * 64 + action_dim * 64 + 64 * 32 + 32 * out_pad)
    cost = pl.CostEstimate(
        flops=B_pad * flops_per_row,
        transcendentals=B_pad * out_pad,
        bytes_accessed=4 * (B_pad * (state_dim + action_dim + out_pad)
                            + w1.size + w2.size + w3p.size),
    )

    out = pl.pallas_call(
        discriminator_kernel,
        out_shape=jax.ShapeDtypeStruct((B_pad, out_pad), jnp.float32),
        grid=grid,
        in_specs=[
            tiled(state_dim),                 # state tile
            tiled(action_dim),                # action tile
            whole(w1_s.shape), whole(w1_a.shape), whole(b1.shape),
            whole(w2.shape), whole(b2.shape),
            whole(w3p.shape), whole(b3p.shape),
        ],
        out_specs=tiled(out_pad),
        compiler_params=pltpu.CompilerParams(
            dimension_semantics=("parallel",)),
        cost_estimate=cost,
    )(state, action, w1_s, w1_a, b1, w2, b2, w3p, b3p)

    return out[:B, :action_dim]


def init_params(key, state_dim, action_dim):
    """Deterministic synthetic parameters matching nn.Linear shapes.

    PyTorch nn.Linear(i, o) has weight (o, i); we store the transpose (i, o).
    Biases are kept 2D (1, o) for clean TPU broadcasting.
    """
    in_dim = state_dim + action_dim
    ks = jax.random.split(key, 6)

    def uni(k, shape, fan_in):
        bound = 1.0 / np.sqrt(fan_in)
        return jax.random.uniform(k, shape, jnp.float32, -bound, bound)

    w1 = uni(ks[0], (in_dim, 64), in_dim)
    b1 = uni(ks[1], (1, 64), in_dim)
    w2 = uni(ks[2], (64, 32), 64)
    b2 = uni(ks[3], (1, 32), 64)
    w3 = uni(ks[4], (32, action_dim), 32)
    b3 = uni(ks[5], (1, action_dim), 32)
    return (w1, b1, w2, b2, w3, b3)


def reference_forward(state, action, params):
    w1, b1, w2, b2, w3, b3 = params
    x = jnp.concatenate([state, action], axis=1)
    x = jax.nn.relu(x @ w1 + b1)
    x = jax.nn.relu(x @ w2 + b2)
    return jax.nn.sigmoid(x @ w3 + b3)


if __name__ == "__main__":
    state_dim, action_dim = 12, 4

    key = jax.random.PRNGKey(0)
    k_s, k_a, k_p, k_s2, k_a2, k_s3, k_a3 = jax.random.split(key, 7)
    params = init_params(k_p, state_dim, action_dim)

    # Small single-tile case (grid = (1,)).
    batch = 8
    state = jax.random.normal(k_s, (batch, state_dim), jnp.float32)
    action = jax.random.normal(k_a, (batch, action_dim), jnp.float32)
    out = jax.block_until_ready(discriminator_forward(state, action, params))
    ref = reference_forward(state, action, params)
    np.testing.assert_allclose(np.asarray(out), np.asarray(ref), rtol=1e-5, atol=1e-5)

    # Multi-tile case with batch padding (grid > 1) to exercise the pipelined grid.
    batch2 = 40
    state2 = jax.random.normal(k_s2, (batch2, state_dim), jnp.float32)
    action2 = jax.random.normal(k_a2, (batch2, action_dim), jnp.float32)
    out2 = jax.block_until_ready(
        discriminator_forward(state2, action2, params, tb=16))
    ref2 = reference_forward(state2, action2, params)
    np.testing.assert_allclose(np.asarray(out2), np.asarray(ref2), rtol=1e-5, atol=1e-5)

    # Ragged batch (not a multiple of 8) to exercise the wrapper-side padding path.
    batch3 = 13
    state3 = jax.random.normal(k_s3, (batch3, state_dim), jnp.float32)
    action3 = jax.random.normal(k_a3, (batch3, action_dim), jnp.float32)
    out3 = jax.block_until_ready(discriminator_forward(state3, action3, params))
    ref3 = reference_forward(state3, action3, params)
    np.testing.assert_allclose(np.asarray(out3), np.asarray(ref3), rtol=1e-5, atol=1e-5)

    print("KERNEL_OK")
</pallas_src>

<mosaic_0001>
module attributes {stable_mosaic.version = 11 : i64} {
  func.func @discriminator_kernel(%arg0: i32, %arg1: memref<8x12xf32, #tpu.memory_space<vmem>>, %arg2: memref<8x4xf32, #tpu.memory_space<vmem>>, %arg3: memref<12x64xf32, #tpu.memory_space<vmem>>, %arg4: memref<4x64xf32, #tpu.memory_space<vmem>>, %arg5: memref<1x64xf32, #tpu.memory_space<vmem>>, %arg6: memref<64x32xf32, #tpu.memory_space<vmem>>, %arg7: memref<1x32xf32, #tpu.memory_space<vmem>>, %arg8: memref<32x128xf32, #tpu.memory_space<vmem>>, %arg9: memref<1x128xf32, #tpu.memory_space<vmem>>, %arg10: memref<8x128xf32, #tpu.memory_space<vmem>>) attributes {dimension_semantics = [#tpu.dimension_semantics<parallel>], iteration_bounds = array<i64: 1>, scalar_prefetch = 0 : i64, scratch_operands = 0 : i64, tpu.core_type = #tpu.core_type<tc>, window_params = [{transform_indices = @transform_0, window_bounds = array<i64: 8, 12>}, {transform_indices = @transform_1, window_bounds = array<i64: 8, 4>}, {pipeline_mode = #tpu.pipeline_mode<synchronous>, transform_indices = @transform_2, window_bounds = array<i64: 12, 64>}, {pipeline_mode = #tpu.pipeline_mode<synchronous>, transform_indices = @transform_3, window_bounds = array<i64: 4, 64>}, {pipeline_mode = #tpu.pipeline_mode<synchronous>, transform_indices = @transform_4, window_bounds = array<i64: 1, 64>}, {pipeline_mode = #tpu.pipeline_mode<synchronous>, transform_indices = @transform_5, window_bounds = array<i64: 64, 32>}, {pipeline_mode = #tpu.pipeline_mode<synchronous>, transform_indices = @transform_6, window_bounds = array<i64: 1, 32>}, {pipeline_mode = #tpu.pipeline_mode<synchronous>, transform_indices = @transform_7, window_bounds = array<i64: 32, 128>}, {pipeline_mode = #tpu.pipeline_mode<synchronous>, transform_indices = @transform_8, window_bounds = array<i64: 1, 128>}, {transform_indices = @transform_9, window_bounds = array<i64: 8, 128>}]} {
    %c0 = arith.constant 0 : index
    %c0_0 = arith.constant 0 : index
    %0 = vector.load %arg1[%c0, %c0_0] : memref<8x12xf32, #tpu.memory_space<vmem>>, vector<8x12xf32>
    %c0_1 = arith.constant 0 : index
    %c0_2 = arith.constant 0 : index
    %1 = vector.load %arg3[%c0_1, %c0_2] : memref<12x64xf32, #tpu.memory_space<vmem>>, vector<12x64xf32>
    %cst = arith.constant dense<0.000000e+00> : vector<8x64xf32>
    %2 = tpu.matmul %0, %1, %cst {dimension_numbers = #tpu.dot_dimension_numbers<[1], [0], [0], [1], [0, 0, 1, 1], [], []>} : vector<8x12xf32>, vector<12x64xf32>, vector<8x64xf32> -> vector<8x64xf32>
    %c0_3 = arith.constant 0 : index
    %c0_4 = arith.constant 0 : index
    %3 = vector.load %arg2[%c0_3, %c0_4] : memref<8x4xf32, #tpu.memory_space<vmem>>, vector<8x4xf32>
    %c0_5 = arith.constant 0 : index
    %c0_6 = arith.constant 0 : index
    %4 = vector.load %arg4[%c0_5, %c0_6] : memref<4x64xf32, #tpu.memory_space<vmem>>, vector<4x64xf32>
    %cst_7 = arith.constant dense<0.000000e+00> : vector<8x64xf32>
    %5 = tpu.matmul %3, %4, %cst_7 {dimension_numbers = #tpu.dot_dimension_numbers<[1], [0], [0], [1], [0, 0, 1, 1], [], []>} : vector<8x4xf32>, vector<4x64xf32>, vector<8x64xf32> -> vector<8x64xf32>
    %6 = arith.addf %2, %5 : vector<8x64xf32>
    %c0_8 = arith.constant 0 : index
    %c0_9 = arith.constant 0 : index
    %7 = vector.load %arg5[%c0_8, %c0_9] : memref<1x64xf32, #tpu.memory_space<vmem>>, vector<1x64xf32>
    %8 = vector.broadcast %7 : vector<1x64xf32> to vector<8x64xf32>
    %9 = arith.addf %6, %8 : vector<8x64xf32>
    %cst_10 = arith.constant 0.000000e+00 : f32
    %10 = vector.broadcast %cst_10 : f32 to vector<8x64xf32>
    %11 = arith.maximumf %9, %10 : vector<8x64xf32>
    %c0_11 = arith.constant 0 : index
    %c0_12 = arith.constant 0 : index
    %12 = vector.load %arg6[%c0_11, %c0_12] : memref<64x32xf32, #tpu.memory_space<vmem>>, vector<64x32xf32>
    %cst_13 = arith.constant dense<0.000000e+00> : vector<8x32xf32>
    %13 = tpu.matmul %11, %12, %cst_13 {dimension_numbers = #tpu.dot_dimension_numbers<[1], [0], [0], [1], [0, 0, 1, 1], [], []>} : vector<8x64xf32>, vector<64x32xf32>, vector<8x32xf32> -> vector<8x32xf32>
    %c0_14 = arith.constant 0 : index
    %c0_15 = arith.constant 0 : index
    %14 = vector.load %arg7[%c0_14, %c0_15] : memref<1x32xf32, #tpu.memory_space<vmem>>, vector<1x32xf32>
    %15 = vector.broadcast %14 : vector<1x32xf32> to vector<8x32xf32>
    %16 = arith.addf %13, %15 : vector<8x32xf32>
    %cst_16 = arith.constant 0.000000e+00 : f32
    %17 = vector.broadcast %cst_16 : f32 to vector<8x32xf32>
    %18 = arith.maximumf %16, %17 : vector<8x32xf32>
    %c0_17 = arith.constant 0 : index
    %c0_18 = arith.constant 0 : index
    %19 = vector.load %arg8[%c0_17, %c0_18] : memref<32x128xf32, #tpu.memory_space<vmem>>, vector<32x128xf32>
    %cst_19 = arith.constant dense<0.000000e+00> : vector<8x128xf32>
    %20 = tpu.matmul %18, %19, %cst_19 {dimension_numbers = #tpu.dot_dimension_numbers<[1], [0], [0], [1], [0, 0, 1, 1], [], []>} : vector<8x32xf32>, vector<32x128xf32>, vector<8x128xf32> -> vector<8x128xf32>
    %c0_20 = arith.constant 0 : index
    %c0_21 = arith.constant 0 : index
    %21 = vector.load %arg9[%c0_20, %c0_21] : memref<1x128xf32, #tpu.memory_space<vmem>>, vector<1x128xf32>
    %22 = vector.broadcast %21 : vector<1x128xf32> to vector<8x128xf32>
    %23 = arith.addf %20, %22 : vector<8x128xf32>
    %24 = arith.negf %23 : vector<8x128xf32>
    %25 = math.exp %24 : vector<8x128xf32>
    %cst_22 = arith.constant 1.000000e+00 : f32
    %26 = vector.broadcast %cst_22 : f32 to vector<8x128xf32>
    %27 = arith.addf %26, %25 : vector<8x128xf32>
    %28 = arith.divf %26, %27 : vector<8x128xf32>
    %c0_23 = arith.constant 0 : index
    %c0_24 = arith.constant 0 : index
    %29 = vector.load %arg10[%c0_23, %c0_24] : memref<8x128xf32, #tpu.memory_space<vmem>>, vector<8x128xf32>
    tpu.vector_store %arg10[%c0_23, %c0_24], %28 {strides = array<i32>} : memref<8x128xf32, #tpu.memory_space<vmem>>, vector<8x128xf32>,
    return
  }
  func.func @transform_0(%arg0: i32) -> (i32, i32) {
    %c0_i32 = arith.constant 0 : i32
    %c0_i32_0 = arith.constant 0 : i32
    return %arg0, %c0_i32 : i32, i32
  }
  func.func @transform_1(%arg0: i32) -> (i32, i32) {
    %c0_i32 = arith.constant 0 : i32
    %c0_i32_0 = arith.constant 0 : i32
    return %arg0, %c0_i32 : i32, i32
  }
  func.func @transform_2(%arg0: i32) -> (i32, i32) {
    %c0_i32 = arith.constant 0 : i32
    %c0_i32_0 = arith.constant 0 : i32
    %c0_i32_1 = arith.constant 0 : i32
    return %c0_i32, %c0_i32_0 : i32, i32
  }
  func.func @transform_3(%arg0: i32) -> (i32, i32) {
    %c0_i32 = arith.constant 0 : i32
    %c0_i32_0 = arith.constant 0 : i32
    %c0_i32_1 = arith.constant 0 : i32
    return %c0_i32, %c0_i32_0 : i32, i32
  }
  func.func @transform_4(%arg0: i32) -> (i32, i32) {
    %c0_i32 = arith.constant 0 : i32
    %c0_i32_0 = arith.constant 0 : i32
    %c0_i32_1 = arith.constant 0 : i32
    return %c0_i32, %c0_i32_0 : i32, i32
  }
  func.func @transform_5(%arg0: i32) -> (i32, i32) {
    %c0_i32 = arith.constant 0 : i32
    %c0_i32_0 = arith.constant 0 : i32
    %c0_i32_1 = arith.constant 0 : i32
    return %c0_i32, %c0_i32_0 : i32, i32
  }
  func.func @transform_6(%arg0: i32) -> (i32, i32) {
    %c0_i32 = arith.constant 0 : i32
    %c0_i32_0 = arith.constant 0 : i32
    %c0_i32_1 = arith.constant 0 : i32
    return %c0_i32, %c0_i32_0 : i32, i32
  }
  func.func @transform_7(%arg0: i32) -> (i32, i32) {
    %c0_i32 = arith.constant 0 : i32
    %c0_i32_0 = arith.constant 0 : i32
    %c0_i32_1 = arith.constant 0 : i32
    return %c0_i32, %c0_i32_0 : i32, i32
  }
  func.func @transform_8(%arg0: i32) -> (i32, i32) {
    %c0_i32 = arith.constant 0 : i32
    %c0_i32_0 = arith.constant 0 : i32
    %c0_i32_1 = arith.constant 0 : i32
    return %c0_i32, %c0_i32_0 : i32, i32
  }
  func.func @transform_9(%arg0: i32) -> (i32, i32) {
    %c0_i32 = arith.constant 0 : i32
    %c0_i32_0 = arith.constant 0 : i32
    return %arg0, %c0_i32 : i32, i32
  }
}

</mosaic_0001>

<llo_original>
// kernel: tpu_custom_call.1
$region0: #{tpu_custom_call.1}
  #allocation0 [shape = 'u32[]', space=smem, size = 0x4, offset = 0x4, fixed_abs, tag = 'smem constant byte address 0x4 - core index']
  #allocation1 [shape = 'u32[144,128]{1,0:T(1,128)}', space=vmem, size = 0x12000, scoped, tag = 'internal scratch']
  %s0 = inlined_call_operand.vmem [shape: f32[8,12], index: 0, kind: input, shape index: {}]
  %s1 = inlined_call_operand.vmem [shape: f32[8,4], index: 1, kind: input, shape index: {}]
  %s2 = inlined_call_operand.vmem [shape: f32[12,64], index: 2, kind: input, shape index: {}]
  %s3 = inlined_call_operand.vmem [shape: f32[4,64], index: 3, kind: input, shape index: {}]
  %s4 = inlined_call_operand.vmem [shape: f32[1,64], index: 4, kind: input, shape index: {}]
  %s5 = inlined_call_operand.vmem [shape: f32[64,32], index: 5, kind: input, shape index: {}]
  %s6 = inlined_call_operand.vmem [shape: f32[1,32], index: 6, kind: input, shape index: {}]
  %s7 = inlined_call_operand.vmem [shape: f32[32,128], index: 7, kind: input, shape index: {}]
  %s8 = inlined_call_operand.vmem [shape: f32[1,128], index: 8, kind: input, shape index: {}]
  %s9 = inlined_call_operand.hbm [shape: f32[8,128], index: 9, kind: output, shape index: {}]
  %s10 = sld [smem:[#allocation0]]
  $region46: #{tpu_custom_call.1} parent=0
    _
  %s12 = ssub.s32 1, %s10
  %s13 = scalar_select 0, %s12, %s10
  $region1: #{tpu_custom_call.1} parent=0
    #allocation2 [shape = 'u8[4096]{0}', space=vmem, size = 0x1000, scoped, tag = 'output window, operand 0, single buffered']
    #allocation3 [shape = 's32[1]{0}', space=sflag, size = 0x4, scoped, tag = 'scoped memory for tpu_custom_call.1']
    %14 = vsyncpa [#allocation3], 0
    // Predicated region
    $region2: #{tpu_custom_call.1} parent=1 // pred_check
      _
    $region3: #{tpu_custom_call.1} parent=1 // pred_check_branch
      %16 = sbr.rel (0) target = $region5
    $region4: #{tpu_custom_call.1} parent=1 // pred_region
      _
    $region5: #{tpu_custom_call.1} parent=1 // pred_fallthru
      _
    // Predicated region
    $region6: #{tpu_custom_call.1} parent=1 // pred_check
      _
    $region7: #{tpu_custom_call.1} parent=1 // pred_check_branch
      %18 = sbr.rel (0) target = $region9
    $region8: #{tpu_custom_call.1} parent=1 // pred_region
      _
    $region9: #{tpu_custom_call.1} parent=1 // pred_fallthru
      _
    // Predicated region
    $region10: #{tpu_custom_call.1} parent=1 // pred_check
      _
    $region11: #{tpu_custom_call.1} parent=1 // pred_check_branch
      %20 = sbr.rel (0) target = $region13
    $region12: #{tpu_custom_call.1} parent=1 // pred_region
      _
    $region13: #{tpu_custom_call.1} parent=1 // pred_fallthru
      _
    // Predicated region
    $region14: #{tpu_custom_call.1} parent=1 // pred_check
      _
    $region15: #{tpu_custom_call.1} parent=1 // pred_check_branch
      %22 = sbr.rel (0) target = $region17
    $region16: #{tpu_custom_call.1} parent=1 // pred_region
      _
    $region17: #{tpu_custom_call.1} parent=1 // pred_fallthru
      _
    // Predicated region
    $region18: #{tpu_custom_call.1} parent=1 // pred_check
      _
    $region19: #{tpu_custom_call.1} parent=1 // pred_check_branch
      %24 = sbr.rel (0) target = $region21
    $region20: #{tpu_custom_call.1} parent=1 // pred_region
      _
    $region21: #{tpu_custom_call.1} parent=1 // pred_fallthru
      _
    // Predicated region
    $region22: #{tpu_custom_call.1} parent=1 // pred_check
      _
    $region23: #{tpu_custom_call.1} parent=1 // pred_check_branch
      %26 = sbr.rel (0) target = $region25
    $region24: #{tpu_custom_call.1} parent=1 // pred_region
      _
    $region25: #{tpu_custom_call.1} parent=1 // pred_fallthru
      _
    // Predicated region
    $region26: #{tpu_custom_call.1} parent=1 // pred_check
      _
    $region27: #{tpu_custom_call.1} parent=1 // pred_check_branch
      %28 = sbr.rel (0) target = $region29
    $region28: #{tpu_custom_call.1} parent=1 // pred_region
      _
    $region29: #{tpu_custom_call.1} parent=1 // pred_fallthru
      _
    // Predicated region
    $region30: #{tpu_custom_call.1} parent=1 // pred_check
      _
    $region31: #{tpu_custom_call.1} parent=1 // pred_check_branch
      %30 = sbr.rel (0) target = $region33
    $region32: #{tpu_custom_call.1} parent=1 // pred_region
      _
    $region33: #{tpu_custom_call.1} parent=1 // pred_fallthru
      _
    // Predicated region
    $region34: #{tpu_custom_call.1} parent=1 // pred_check
      _
    $region35: #{tpu_custom_call.1} parent=1 // pred_check_branch
      %32 = sbr.rel (0) target = $region37
    $region36: #{tpu_custom_call.1} parent=1 // pred_region
      _
    $region37: #{tpu_custom_call.1} parent=1 // pred_fallthru
      _
    %v33 = vld [vmem:[%s0] sm:$0xff]
    %v34 = vld [vmem:[%s2] sm:$0xff]
    %v35 = vld [vmem:[%s2 + $0x8] sm:$0xf]
    %v36 = vld [vmem:[%s1] sm:$0xff]
    %v37 = vld [vmem:[%s3] sm:$0xf]
    %vm38 = vcmask 31744
    %v40 = vsel %vm38, %v36, 0
    %vm42 = vcmask 1043456
    %v44 = vsel %vm42, %v37, 0
    %46 = vmatprep.subr.mxu0 0.0
    %47 = vmatpush1.msra.mxu0 0.0
    %48 = vmatprep.subr.mxu0 0.0
    %49 = vmatpush1.msra.mxu0 0.0
    %50 = vmatprep.subr.mxu0 0.0
    %51 = vmatpush1.msra.mxu0 0.0
    %52 = vmatprep.subr.mxu0 0.0
    %53 = vmatpush1.msra.mxu0 0.0
    %54 = vmatprep.subr.mxu0 0.0
    %55 = vmatpush1.msra.mxu0 0.0
    %56 = vmatprep.subr.mxu0 0.0
    %57 = vmatpush1.msra.mxu0 0.0
    %58 = vmatprep.subr.mxu0 0.0
    %59 = vmatpush1.msra.mxu0 0.0
    %60 = vmatprep.subr.mxu0 0.0
    %61 = vmatpush1.msra.mxu0 0.0
    %62 = vmatprep.subr.mxu0 0.0
    %63 = vmatpush1.msra.mxu0 0.0
    %64 = vmatprep.subr.mxu0 0.0
    %65 = vmatpush1.msra.mxu0 0.0
    %66 = vmatprep.subr.mxu0 0.0
    %67 = vmatpush1.msra.mxu0 0.0
    %68 = vmatprep.subr.mxu0 0.0
    %69 = vmatpush1.msra.mxu0 0.0
    %70 = vmatprep.subr.mxu0 0.0
    %71 = vmatpush1.msra.mxu0 0.0
    %72 = vmatprep.subr.mxu0 0.0
    %73 = vmatpush1.msra.mxu0 0.0
    %74 = vmatprep.subr.mxu0 0.0
    %75 = vmatpush1.msra.mxu0 0.0
    %76 = vmatprep.subr.mxu0 0.0
    %77 = vmatpush1.msra.mxu0 %v44
    %78 = vmatprep.subr.mxu0 0.0
    %79 = vmatpush2.msra.mxu0 0.0
    %80 = vmatprep.subr.mxu0 0.0
    %81 = vmatpush2.msra.mxu0 0.0
    %82 = vmatprep.subr.mxu0 0.0
    %83 = vmatpush2.msra.mxu0 0.0
    %84 = vmatprep.subr.mxu0 0.0
    %85 = vmatpush2.msra.mxu0 0.0
    %86 = vmatprep.subr.mxu0 0.0
    %87 = vmatpush2.msra.mxu0 0.0
    %88 = vmatprep.subr.mxu0 0.0
    %89 = vmatpush2.msra.mxu0 0.0
    %90 = vmatprep.subr.mxu0 0.0
    %91 = vmatpush2.msra.mxu0 0.0
    %92 = vmatprep.subr.mxu0 0.0
    %93 = vmatpush2.msra.mxu0 0.0
    %94 = vmatprep.subr.mxu0 0.0
    %95 = vmatpush2.msra.mxu0 0.0
    %96 = vmatprep.subr.mxu0 0.0
    %97 = vmatpush2.msra.mxu0 0.0
    %98 = vmatprep.subr.mxu0 0.0
    %99 = vmatpush2.msra.mxu0 0.0
    %100 = vmatprep.subr.mxu0 0.0
    %101 = vmatpush2.msra.mxu0 0.0
    %102 = vmatprep.subr.mxu0 0.0
    %103 = vmatpush2.msra.mxu0 0.0
    %104 = vmatprep.subr.mxu0 0.0
    %105 = vmatpush2.msra.mxu0 0.0
    %106 = vmatprep.subr.mxu0 0.0
    %107 = vmatpush2.msra.mxu0 0.0
    %108 = vmatprep.subr.mxu0 0.0
    %109 = vmatpush2.msra.mxu0 0.0
    %110 = vmatprep.mubr.f32.mxu0 0.0
    %111 = vmatmul.mubr.f32.gmra.mxu0 %v40
    %v112 = vpop.f32.mrf.mxu0
    %v113 = vadd.f32 0.0, %v112
    %v114 = vpop.f32.mrf.mxu0
    %115 = vdwg.mxu0
    %vm116 = vcmask 97280
    %v118 = vsel %vm116, %v33, 0
    %v121 = vsel %vm42, %v35, 0
    %123 = vmatprep.subr.mxu0 0.0
    %124 = vmatpush1.msra.mxu0 0.0
    %125 = vmatprep.subr.mxu0 0.0
    %126 = vmatpush1.msra.mxu0 0.0
    %127 = vmatprep.subr.mxu0 0.0
    %128 = vmatpush1.msra.mxu0 0.0
    %129 = vmatprep.subr.mxu0 0.0
    %130 = vmatpush1.msra.mxu0 0.0
    %131 = vmatprep.subr.mxu0 0.0
    %132 = vmatpush1.msra.mxu0 0.0
    %133 = vmatprep.subr.mxu0 0.0
    %134 = vmatpush1.msra.mxu0 0.0
    %135 = vmatprep.subr.mxu0 0.0
    %136 = vmatpush1.msra.mxu0 0.0
    %137 = vmatprep.subr.mxu0 0.0
    %138 = vmatpush1.msra.mxu0 0.0
    %139 = vmatprep.subr.mxu0 0.0
    %140 = vmatpush1.msra.mxu0 0.0
    %141 = vmatprep.subr.mxu0 0.0
    %142 = vmatpush1.msra.mxu0 0.0
    %143 = vmatprep.subr.mxu0 0.0
    %144 = vmatpush1.msra.mxu0 0.0
    %145 = vmatprep.subr.mxu0 0.0
    %146 = vmatpush1.msra.mxu0 0.0
    %147 = vmatprep.subr.mxu0 0.0
    %148 = vmatpush1.msra.mxu0 0.0
    %149 = vmatprep.subr.mxu0 0.0
    %150 = vmatpush1.msra.mxu0 0.0
    %151 = vmatprep.subr.mxu0 0.0
    %152 = vmatpush1.msra.mxu0 %v121
    %153 = vmatprep.subr.mxu0 0.0
    %154 = vmatpush1.msra.mxu0 %v34
    %155 = vmatprep.subr.mxu0 0.0
    %156 = vmatpush2.msra.mxu0 0.0
    %157 = vmatprep.subr.mxu0 0.0
    %158 = vmatpush2.msra.mxu0 0.0
    %159 = vmatprep.subr.mxu0 0.0
    %160 = vmatpush2.msra.mxu0 0.0
    %161 = vmatprep.subr.mxu0 0.0
    %162 = vmatpush2.msra.mxu0 0.0
    %163 = vmatprep.subr.mxu0 0.0
    %164 = vmatpush2.msra.mxu0 0.0
    %165 = vmatprep.subr.mxu0 0.0
    %166 = vmatpush2.msra.mxu0 0.0
    %167 = vmatprep.subr.mxu0 0.0
    %168 = vmatpush2.msra.mxu0 0.0
    %169 = vmatprep.subr.mxu0 0.0
    %170 = vmatpush2.msra.mxu0 0.0
    %171 = vmatprep.subr.mxu0 0.0
    %172 = vmatpush2.msra.mxu0 0.0
    %173 = vmatprep.subr.mxu0 0.0
    %174 = vmatpush2.msra.mxu0 0.0
    %175 = vmatprep.subr.mxu0 0.0
    %176 = vmatpush2.msra.mxu0 0.0
    %177 = vmatprep.subr.mxu0 0.0
    %178 = vmatpush2.msra.mxu0 0.0
    %179 = vmatprep.subr.mxu0 0.0
    %180 = vmatpush2.msra.mxu0 0.0
    %181 = vmatprep.subr.mxu0 0.0
    %182 = vmatpush2.msra.mxu0 0.0
    %183 = vmatprep.subr.mxu0 0.0
    %184 = vmatpush2.msra.mxu0 0.0
    %185 = vmatprep.subr.mxu0 0.0
    %186 = vmatpush2.msra.mxu0 0.0
    %187 = vmatprep.mubr.f32.mxu0 0.0
    %188 = vmatmul.mubr.f32.gmra.mxu0 %v118
    %v189 = vpop.f32.mrf.mxu0
    %v190 = vadd.f32 %v113, %v189
    %v191 = vpop.f32.mrf.mxu0
    %192 = vdwg.mxu0
    %v193 = vld [vmem:[%s4] sm:$0x1]
    %v195 = vlaneseq
    %v196 = vshrl.u32 %v195, 7
    %v197 = vsub.s32 0, %v196
    %v198 = vrot.slane %v193, %v197
    %v200 = vadd.f32 %v190, %v198
    %v201 = vmax.f32 %v200, 0.0
    %v202 = vld [vmem:[%s5] sm:$0xff]
    %v203 = vld [vmem:[%s5 + $0x8] sm:$0xff]
    %v204 = vld [vmem:[%s5 + $0x10] sm:$0xff]
    %v205 = vld [vmem:[%s5 + $0x18] sm:$0xff]
    %v206 = vld [vmem:[%s5 + $0x20] sm:$0xff]
    %v207 = vld [vmem:[%s5 + $0x28] sm:$0xff]
    %v208 = vld [vmem:[%s5 + $0x30] sm:$0xff]
    %v209 = vld [vmem:[%s5 + $0x38] sm:$0xff]
    %v210 = vld [vmem:[%s6] sm:$0x1]
    %v212 = vlaneseq
    %v213 = vshrl.u32 %v212, 7
    %v214 = vsub.s32 0, %v213
    %v215 = vrot.slane %v210, %v214
    %vm217 = vcmask 523264
    %v219 = vsel %vm217, %v201, 0
    %221 = vmatprep.subr.mxu0 0.0
    %222 = vmatpush1.msra.mxu0 0.0
    %223 = vmatprep.subr.mxu0 0.0
    %224 = vmatpush1.msra.mxu0 0.0
    %225 = vmatprep.subr.mxu0 0.0
    %226 = vmatpush1.msra.mxu0 0.0
    %227 = vmatprep.subr.mxu0 0.0
    %228 = vmatpush1.msra.mxu0 0.0
    %229 = vmatprep.subr.mxu0 0.0
    %230 = vmatpush1.msra.mxu0 0.0
    %231 = vmatprep.subr.mxu0 0.0
    %232 = vmatpush1.msra.mxu0 0.0
    %233 = vmatprep.subr.mxu0 0.0
    %234 = vmatpush1.msra.mxu0 0.0
    %235 = vmatprep.subr.mxu0 0.0
    %236 = vmatpush1.msra.mxu0 0.0
    %237 = vmatprep.subr.mxu0 0.0
    %238 = vmatpush1.msra.mxu0 %v209
    %239 = vmatprep.subr.mxu0 0.0
    %240 = vmatpush1.msra.mxu0 %v208
    %241 = vmatprep.subr.mxu0 0.0
    %242 = vmatpush1.msra.mxu0 %v207
    %243 = vmatprep.subr.mxu0 0.0
    %244 = vmatpush1.msra.mxu0 %v206
    %245 = vmatprep.subr.mxu0 0.0
    %246 = vmatpush1.msra.mxu0 %v205
    %247 = vmatprep.subr.mxu0 0.0
    %248 = vmatpush1.msra.mxu0 %v204
    %249 = vmatprep.subr.mxu0 0.0
    %250 = vmatpush1.msra.mxu0 %v203
    %251 = vmatprep.subr.mxu0 0.0
    %252 = vmatpush1.msra.mxu0 %v202
    %253 = vmatprep.subr.mxu0 0.0
    %254 = vmatpush2.msra.mxu0 0.0
    %255 = vmatprep.subr.mxu0 0.0
    %256 = vmatpush2.msra.mxu0 0.0
    %257 = vmatprep.subr.mxu0 0.0
    %258 = vmatpush2.msra.mxu0 0.0
    %259 = vmatprep.subr.mxu0 0.0
    %260 = vmatpush2.msra.mxu0 0.0
    %261 = vmatprep.subr.mxu0 0.0
    %262 = vmatpush2.msra.mxu0 0.0
    %263 = vmatprep.subr.mxu0 0.0
    %264 = vmatpush2.msra.mxu0 0.0
    %265 = vmatprep.subr.mxu0 0.0
    %266 = vmatpush2.msra.mxu0 0.0
    %267 = vmatprep.subr.mxu0 0.0
    %268 = vmatpush2.msra.mxu0 0.0
    %269 = vmatprep.subr.mxu0 0.0
    %270 = vmatpush2.msra.mxu0 0.0
    %271 = vmatprep.subr.mxu0 0.0
    %272 = vmatpush2.msra.mxu0 0.0
    %273 = vmatprep.subr.mxu0 0.0
    %274 = vmatpush2.msra.mxu0 0.0
    %275 = vmatprep.subr.mxu0 0.0
    %276 = vmatpush2.msra.mxu0 0.0
    %277 = vmatprep.subr.mxu0 0.0
    %278 = vmatpush2.msra.mxu0 0.0
    %279 = vmatprep.subr.mxu0 0.0
    %280 = vmatpush2.msra.mxu0 0.0
    %281 = vmatprep.subr.mxu0 0.0
    %282 = vmatpush2.msra.mxu0 0.0
    %283 = vmatprep.subr.mxu0 0.0
    %284 = vmatpush2.msra.mxu0 0.0
    %285 = vmatprep.mubr.f32.mxu0 0.0
    %286 = vmatmul.mubr.f32.gmra.mxu0 %v219
    %v287 = vpop.f32.mrf.mxu0
    %v288 = vadd.f32 %v215, %v287
    %v289 = vpop.f32.mrf.mxu0
    %290 = vdwg.mxu0
    %v291 = vmax.f32 %v288, 0.0
    %v292 = vld [vmem:[%s7] sm:$0xff]
    %v293 = vld [vmem:[%s7 + $0x8] sm:$0xff]
    %v294 = vld [vmem:[%s7 + $0x10] sm:$0xff]
    %v295 = vld [vmem:[%s7 + $0x18] sm:$0xff]
    %v296 = vld [vmem:[%s8] sm:$0x1]
    %v298 = vlaneseq
    %v299 = vshrl.u32 %v298, 7
    %v300 = vsub.s32 0, %v299
    %v301 = vrot.slane %v296, %v300
    %vm303 = vcmask 261120
    %v305 = vsel %vm303, %v291, 0
    %307 = vmatprep.subr.mxu0 0.0
    %308 = vmatpush1.msra.mxu0 0.0
    %309 = vmatprep.subr.mxu0 0.0
    %310 = vmatpush1.msra.mxu0 0.0
    %311 = vmatprep.subr.mxu0 0.0
    %312 = vmatpush1.msra.mxu0 0.0
    %313 = vmatprep.subr.mxu0 0.0
    %314 = vmatpush1.msra.mxu0 0.0
    %315 = vmatprep.subr.mxu0 0.0
    %316 = vmatpush1.msra.mxu0 0.0
    %317 = vmatprep.subr.mxu0 0.0
    %318 = vmatpush1.msra.mxu0 0.0
    %319 = vmatprep.subr.mxu0 0.0
    %320 = vmatpush1.msra.mxu0 0.0
    %321 = vmatprep.subr.mxu0 0.0
    %322 = vmatpush1.msra.mxu0 0.0
    %323 = vmatprep.subr.mxu0 0.0
    %324 = vmatpush1.msra.mxu0 0.0
    %325 = vmatprep.subr.mxu0 0.0
    %326 = vmatpush1.msra.mxu0 0.0
    %327 = vmatprep.subr.mxu0 0.0
    %328 = vmatpush1.msra.mxu0 0.0
    %329 = vmatprep.subr.mxu0 0.0
    %330 = vmatpush1.msra.mxu0 0.0
    %331 = vmatprep.subr.mxu0 0.0
    %332 = vmatpush1.msra.mxu0 %v295
    %333 = vmatprep.subr.mxu0 0.0
    %334 = vmatpush1.msra.mxu0 %v294
    %335 = vmatprep.subr.mxu0 0.0
    %336 = vmatpush1.msra.mxu0 %v293
    %337 = vmatprep.subr.mxu0 0.0
    %338 = vmatpush1.msra.mxu0 %v292
    %339 = vmatprep.subr.mxu0 0.0
    %340 = vmatpush2.msra.mxu0 0.0
    %341 = vmatprep.subr.mxu0 0.0
    %342 = vmatpush2.msra.mxu0 0.0
    %343 = vmatprep.subr.mxu0 0.0
    %344 = vmatpush2.msra.mxu0 0.0
    %345 = vmatprep.subr.mxu0 0.0
    %346 = vmatpush2.msra.mxu0 0.0
    %347 = vmatprep.subr.mxu0 0.0
    %348 = vmatpush2.msra.mxu0 0.0
    %349 = vmatprep.subr.mxu0 0.0
    %350 = vmatpush2.msra.mxu0 0.0
    %351 = vmatprep.subr.mxu0 0.0
    %352 = vmatpush2.msra.mxu0 0.0
    %353 = vmatprep.subr.mxu0 0.0
    %354 = vmatpush2.msra.mxu0 0.0
    %355 = vmatprep.subr.mxu0 0.0
    %356 = vmatpush2.msra.mxu0 0.0
    %357 = vmatprep.subr.mxu0 0.0
    %358 = vmatpush2.msra.mxu0 0.0
    %359 = vmatprep.subr.mxu0 0.0
    %360 = vmatpush2.msra.mxu0 0.0
    %361 = vmatprep.subr.mxu0 0.0
    %362 = vmatpush2.msra.mxu0 0.0
    %363 = vmatprep.subr.mxu0 0.0
    %364 = vmatpush2.msra.mxu0 0.0
    %365 = vmatprep.subr.mxu0 0.0
    %366 = vmatpush2.msra.mxu0 0.0
    %367 = vmatprep.subr.mxu0 0.0
    %368 = vmatpush2.msra.mxu0 0.0
    %369 = vmatprep.subr.mxu0 0.0
    %370 = vmatpush2.msra.mxu0 0.0
    %371 = vmatprep.mubr.f32.mxu0 0.0
    %372 = vmatmul.mubr.f32.gmra.mxu0 %v305
    %v373 = vpop.f32.mrf.mxu0
    %v374 = vadd.f32 %v301, %v373
    %v375 = vpop.f32.mrf.mxu0
    %376 = vdwg.mxu0
    %v377 = vxor.u32 %v374, 2147483648
    %v378 = vmul.f32 %v377, 1.442695
    %v379 = vpow.pop %v378
    %v380 = vadd.f32 %v379, 1.0
    %v381 = vrcp.pop %v380
    %v382 = vmul.f32 1.0, %v381
    %383 = vst [vmem:[#allocation2] sm:$0xff] %v382
    // Predicated region
    $region38: #{tpu_custom_call.1} parent=1 // pred_check
      _
    $region39: #{tpu_custom_call.1} parent=1 // pred_check_branch
      %385 = sbr.rel (0) target = $region41
    $region40: #{tpu_custom_call.1} parent=1 // pred_region
      %s387 = ssub.s32 128, 128
      %388 = vsyncadd [#allocation3], %s387
      %s390 = sshll.u32 [#allocation2], 4
      %s391 = int_to_ptr.vmem [resolvable:$true] %s390
      %393 = dma.vmem_to_hbm [thread:$0]  %s391, 128, %s9, [#allocation3]
    $region41: #{tpu_custom_call.1} parent=1 // pred_fallthru
      _
    // Predicated region
    $region42: #{tpu_custom_call.1} parent=1 // pred_check
      _
    $region43: #{tpu_custom_call.1} parent=1 // pred_check_branch
      %395 = sbr.rel (0) target = $region45
    $region44: #{tpu_custom_call.1} parent=1 // pred_region
      %396 = dma.done [#allocation3], 128
    $region45: #{tpu_custom_call.1} parent=1 // pred_fallthru
      _
    %397 = vsyncpa [#allocation3], 1

</llo_original>
